<compile_context>
chip_gen: v7x
topology: tpu7x:2x2x1
jax: 0.10.0
libtpu: 0.0.40
codegen_flags: <defaults>
</compile_context>

<pallas_src>
import jax
import jax.numpy as jnp
from jax.experimental import pallas as pl
from jax.experimental.pallas import tpu as pltpu

WEIGHT_FACTOR = 1e-08  # config without 'enable_fp16' -> 1e-08


def weight_pooler_kernel(term_ref, mask_ref, w_ref, out_ref):
    # term_ref: (TB, S, H) VMEM (native dtype)   mask_ref: (TB, S) VMEM (f32)
    # w_ref   : (1, 1, H)  VMEM (f32)            out_ref : (TB, H) VMEM
    x = term_ref[...]                                  # (TB, S, H), native dtype
    w = w_ref[...]                                     # (1, 1, H), f32

    # Linear(H -> 1) without bias: VPU broadcast-multiply (f32-promoted) over H
    # lanes + XLU lane-reduce.  (The bias cancels in the softmax below.)
    logits = jnp.sum(x * w, axis=-1)                   # (TB, S), f32

    # Additive mask: padded positions (mask == 0) get ~ -1e8.
    m = mask_ref[...]                                  # (TB, S), f32
    logits = logits + (m - 1.0) * (1.0 / WEIGHT_FACTOR)

    # Numerically stable softmax over the sequence axis (lane axis here).
    # A fully-masked row yields a uniform softmax over padded positions,
    # matching the PyTorch reference behavior.
    logits = logits - jnp.max(logits, axis=-1, keepdims=True)
    e = jnp.exp(logits)                                # EUP
    denom = jnp.sum(e, axis=-1, keepdims=True)         # (TB, 1)
    w_soft = e * pl.reciprocal(denom, approx=False)    # exact: keeps 1e-4 tol

    # Weighted sum over seq: broadcast w_soft over H lanes, sublane-reduce S.
    pooled = jnp.sum(w_soft[:, :, None] * x, axis=1)   # (TB, H), f32
    out_ref[...] = pooled.astype(out_ref.dtype)


def _pick_batch_tile(B, S, H, itemsize, block_bytes):
    """Batch rows per grid step: ~block_bytes of term data, sublane-aligned,
    >= 2 and preferably an even number of grid steps (v7x megacore balance)."""
    if B <= 8:
        return B                                   # single step; block == array dims
    bytes_per_row = max(1, S * H * itemsize)
    tb = max(8, min(B, block_bytes // bytes_per_row))
    tb = (tb // 8) * 8                             # sublane-dense mask/out blocks
    steps = -(-B // tb)
    if steps == 1:
        steps = 2                                  # let v7x shard across its 2 TCs
    if steps % 2:
        steps += 1                                 # even step count -> no idle TC tail
    tb = -(-B // steps)
    tb = max(8, ((tb + 7) // 8) * 8)
    return min(tb, B)


def weight_pooler(term_tensor, mask, weight, bias=None,
                  block_bytes=8 * 1024 * 1024):
    """term_tensor: (B, S, H); mask: (B, S); weight: (1, H); bias: (1,) -> (B, H).

    `bias` is accepted for API parity with nn.Linear but is not used: a bias on
    the (H -> 1) weighting head is constant across the softmax axis and cancels
    exactly, so the forward output is unchanged.
    """
    del bias
    B, S, H = term_tensor.shape
    mask2 = mask.reshape(B, S).astype(jnp.float32)
    weight3 = weight.reshape(1, 1, H).astype(jnp.float32)

    tb = _pick_batch_tile(B, S, H, term_tensor.dtype.itemsize, block_bytes)
    grid = (pl.cdiv(B, tb),)

    return pl.pallas_call(
        weight_pooler_kernel,
        out_shape=jax.ShapeDtypeStruct((B, H), term_tensor.dtype),
        grid_spec=pltpu.PrefetchScalarGridSpec(
            num_scalar_prefetch=0,
            grid=grid,
            in_specs=[
                pl.BlockSpec((tb, S, H), lambda b: (b, 0, 0)),   # term block
                pl.BlockSpec((tb, S), lambda b: (b, 0)),         # mask block
                pl.BlockSpec((1, 1, H), lambda b: (0, 0, 0)),    # weight (resident)
            ],
            out_specs=pl.BlockSpec((tb, H), lambda b: (b, 0)),   # dense (tb, H)
        ),
        compiler_params=pltpu.CompilerParams(
            dimension_semantics=("parallel",),
            # Above v5e's 16 MiB / v6e's 32 MiB scoped defaults, below v7x's
            # 64 MiB/TC physical VMEM with double-buffered ~8 MiB term blocks.
            vmem_limit_bytes=48 * 1024 * 1024,
        ),
    )(term_tensor, mask2, weight3)


def weight_pooler_ref(term_tensor, mask, weight, bias):
    """Pure-JAX reference matching the PyTorch forward (bias included)."""
    logits = jnp.einsum("bsh,oh->bso", term_tensor, weight,
                        precision=jax.lax.Precision.HIGHEST) + bias   # (B, S, 1)
    logits = logits + (mask - 1.0)[..., None] / WEIGHT_FACTOR
    w_soft = jax.nn.softmax(logits, axis=1)
    return jnp.sum(term_tensor * w_soft, axis=1)


if __name__ == "__main__":
    B, S, H = 16, 8, 32
    key = jax.random.PRNGKey(0)
    k_term, k_mask, k_w, k_b = jax.random.split(key, 4)

    term_tensor = jax.random.normal(k_term, (B, S, H), dtype=jnp.float32)
    # mask: 1.0 for valid positions, 0.0 for padded positions
    mask = (jax.random.uniform(k_mask, (B, S)) > 0.3).astype(jnp.float32)
    mask = mask.at[:, 0].set(1.0)  # at least one valid token per row

    # nn.Linear(hidden_size, 1): weight (1, H), bias (1,)
    weight = jax.random.normal(k_w, (1, H), dtype=jnp.float32) / jnp.sqrt(H)
    bias = jax.random.normal(k_b, (1,), dtype=jnp.float32) * 0.01

    out = jax.block_until_ready(weight_pooler(term_tensor, mask, weight, bias))
    ref = weight_pooler_ref(term_tensor, mask, weight, bias)

    assert out.shape == (B, H)
    max_err = float(jnp.max(jnp.abs(out - ref)))
    assert jnp.allclose(out, ref, atol=1e-4, rtol=1e-4), f"max abs err {max_err}"

    print("KERNEL_OK")
</pallas_src>

<mosaic_0001>
module attributes {stable_mosaic.version = 11 : i64} {
  func.func @weight_pooler_kernel(%arg0: i32, %arg1: memref<8x8x32xf32, #tpu.memory_space<vmem>>, %arg2: memref<8x8xf32, #tpu.memory_space<vmem>>, %arg3: memref<1x1x32xf32, #tpu.memory_space<vmem>>, %arg4: memref<8x32xf32, #tpu.memory_space<vmem>>) attributes {dimension_semantics = [#tpu.dimension_semantics<parallel>], iteration_bounds = array<i64: 2>, scalar_prefetch = 0 : i64, scratch_operands = 0 : i64, tpu.core_type = #tpu.core_type<tc>, window_params = [{transform_indices = @transform_0, window_bounds = array<i64: 8, 8, 32>}, {transform_indices = @transform_1, window_bounds = array<i64: 8, 8>}, {pipeline_mode = #tpu.pipeline_mode<synchronous>, transform_indices = @transform_2, window_bounds = array<i64: 1, 1, 32>}, {transform_indices = @transform_3, window_bounds = array<i64: 8, 32>}]} {
    %c0 = arith.constant 0 : index
    %c0_0 = arith.constant 0 : index
    %c0_1 = arith.constant 0 : index
    %0 = vector.load %arg1[%c0, %c0_0, %c0_1] : memref<8x8x32xf32, #tpu.memory_space<vmem>>, vector<8x8x32xf32>
    %c0_2 = arith.constant 0 : index
    %c0_3 = arith.constant 0 : index
    %c0_4 = arith.constant 0 : index
    %1 = vector.load %arg3[%c0_2, %c0_3, %c0_4] : memref<1x1x32xf32, #tpu.memory_space<vmem>>, vector<1x1x32xf32>
    %2 = vector.broadcast %1 : vector<1x1x32xf32> to vector<8x8x32xf32>
    %3 = arith.mulf %0, %2 : vector<8x8x32xf32>
    %cst = arith.constant dense<0.000000e+00> : vector<8x8xf32>
    %4 = vector.multi_reduction <add>, %3, %cst [2] : vector<8x8x32xf32> to vector<8x8xf32>
    %c0_5 = arith.constant 0 : index
    %c0_6 = arith.constant 0 : index
    %5 = vector.load %arg2[%c0_5, %c0_6] : memref<8x8xf32, #tpu.memory_space<vmem>>, vector<8x8xf32>
    %cst_7 = arith.constant 1.000000e+00 : f32
    %6 = vector.broadcast %cst_7 : f32 to vector<8x8xf32>
    %7 = arith.subf %5, %6 : vector<8x8xf32>
    %cst_8 = arith.constant 1.000000e+08 : f32
    %8 = vector.broadcast %cst_8 : f32 to vector<8x8xf32>
    %9 = arith.mulf %7, %8 : vector<8x8xf32>
    %10 = arith.addf %4, %9 : vector<8x8xf32>
    %cst_9 = arith.constant dense<0xFF800000> : vector<8xf32>
    %11 = vector.multi_reduction <maximumf>, %10, %cst_9 [1] : vector<8x8xf32> to vector<8xf32>
    %12 = vector.shape_cast %11 : vector<8xf32> to vector<8x1xf32>
    %13 = vector.broadcast %12 : vector<8x1xf32> to vector<8x8xf32>
    %14 = arith.subf %10, %13 : vector<8x8xf32>
    %15 = math.exp %14 : vector<8x8xf32>
    %cst_10 = arith.constant dense<0.000000e+00> : vector<8xf32>
    %16 = vector.multi_reduction <add>, %15, %cst_10 [1] : vector<8x8xf32> to vector<8xf32>
    %17 = vector.shape_cast %16 : vector<8xf32> to vector<8x1xf32>
    %18 = tpu.reciprocal %17 : vector<8x1xf32> -> vector<8x1xf32>
    %19 = vector.broadcast %18 : vector<8x1xf32> to vector<8x8xf32>
    %20 = arith.mulf %15, %19 : vector<8x8xf32>
    %21 = vector.shape_cast %20 : vector<8x8xf32> to vector<8x8x1xf32>
    %22 = vector.broadcast %21 : vector<8x8x1xf32> to vector<8x8x32xf32>
    %23 = arith.mulf %22, %0 : vector<8x8x32xf32>
    %cst_11 = arith.constant dense<0.000000e+00> : vector<8x32xf32>
    %24 = vector.multi_reduction <add>, %23, %cst_11 [1] : vector<8x8x32xf32> to vector<8x32xf32>
    %c0_12 = arith.constant 0 : index
    %c0_13 = arith.constant 0 : index
    %25 = vector.load %arg4[%c0_12, %c0_13] : memref<8x32xf32, #tpu.memory_space<vmem>>, vector<8x32xf32>
    tpu.vector_store %arg4[%c0_12, %c0_13], %24 {strides = array<i32>} : memref<8x32xf32, #tpu.memory_space<vmem>>, vector<8x32xf32>,
    return
  }
  func.func @transform_0(%arg0: i32) -> (i32, i32, i32) {
    %c0_i32 = arith.constant 0 : i32
    %c0_i32_0 = arith.constant 0 : i32
    %c0_i32_1 = arith.constant 0 : i32
    return %arg0, %c0_i32, %c0_i32_0 : i32, i32, i32
  }
  func.func @transform_1(%arg0: i32) -> (i32, i32) {
    %c0_i32 = arith.constant 0 : i32
    %c0_i32_0 = arith.constant 0 : i32
    return %arg0, %c0_i32 : i32, i32
  }
  func.func @transform_2(%arg0: i32) -> (i32, i32, i32) {
    %c0_i32 = arith.constant 0 : i32
    %c0_i32_0 = arith.constant 0 : i32
    %c0_i32_1 = arith.constant 0 : i32
    %c0_i32_2 = arith.constant 0 : i32
    return %c0_i32, %c0_i32_0, %c0_i32_1 : i32, i32, i32
  }
  func.func @transform_3(%arg0: i32) -> (i32, i32) {
    %c0_i32 = arith.constant 0 : i32
    %c0_i32_0 = arith.constant 0 : i32
    return %arg0, %c0_i32 : i32, i32
  }
}

</mosaic_0001>

<llo_original>
// kernel: tpu_custom_call.1
$region0: #{tpu_custom_call.1}
  #allocation0 [shape = 'u32[]', space=smem, size = 0x4, offset = 0x4, fixed_abs, tag = 'smem constant byte address 0x4 - core index']
  #allocation1 [shape = 'u32[144,128]{1,0:T(1,128)}', space=vmem, size = 0x12000, scoped, tag = 'internal scratch']
  %s0 = inlined_call_operand.hbm [shape: f32[16,8,32], index: 0, kind: input, shape index: {}]
  %s1 = inlined_call_operand.vmem [shape: f32[16,8], index: 1, kind: input, shape index: {}]
  %s2 = inlined_call_operand.vmem [shape: f32[1,1,32], index: 2, kind: input, shape index: {}]
  %s3 = inlined_call_operand.hbm [shape: f32[16,32], index: 3, kind: output, shape index: {}]
  %s4 = sld [smem:[#allocation0]]
  $region49: #{tpu_custom_call.1} parent=0
    _
  %s6 = ssub.s32 1, %s4
  %s7 = scalar_select 0, %s6, %s4
  $region1: #{tpu_custom_call.1} parent=0
    #allocation2 [shape = 'u8[65536]{0}', space=vmem, size = 0x10000, scoped, tag = 'input window, operand 0']
    #allocation3 [shape = 's32[2]{0}', space=sflag, size = 0x8, scoped, tag = 'scoped memory for tpu_custom_call.1']
    #allocation4 [shape = 's32[2]{0}', space=sflag, size = 0x8, scoped, tag = 'scoped memory for tpu_custom_call.1']
    #allocation5 [shape = 'u8[8192]{0}', space=vmem, size = 0x2000, scoped, tag = 'output window, operand 0']
    %8 = vsyncpa [#allocation3], 0
    %s9 = scalar_lea.sflag [#allocation3], 1
    %10 = vsyncpa %s9, 0
    %11 = vsyncpa [#allocation4], 0
    %s12 = scalar_lea.sflag [#allocation4], 1
    %13 = vsyncpa %s12, 0
    loop: start=0, step=1, limit=4
    $region2: #{tpu_custom_call.1} parent=1 // loop_pre_header
      _
    $region3: #{tpu_custom_call.1} parent=1 // loop_header
      %s15 = sphi 0, %s19
      %p16 = scmp.ge.s32.totalorder %s15, 4
      %s25 = sphi 0, %s27
      %s28 = sphi 0, %s25
      %s29 = sphi 0, %s28
      %s45 = sphi 0, %s29
      %s51 = sphi 0, %s53
      %s54 = sphi 0, %s51
      %s55 = sphi 0, %s54
      %s71 = sphi 0, %s55
      %s75 = sphi 0, %s75
      %s77 = sphi 0, %s75
      %s78 = sphi 0, %s77
      %s92 = sphi 0, %s78
      %s98 = sphi 0, %s100
      %s101 = sphi 0, %s98
      %s102 = sphi 0, %s101
      %s118 = sphi 0, %s102
    $region4: #{tpu_custom_call.1} parent=1 // loop_header_branch
      %18 = sbr.rel (%p16) target = $region8
    $region5: #{tpu_custom_call.1} parent=1 // loop_body
      %s20 = ssub.s32 %s15, 1
      %s21 = ssub.s32 %s15, 2
      %s22 = sadd.s32 %s15, 1
      %s23 = ssub.s32 %s15, %s22
      %p24 = scmp.eq.s32.totalorder %s23, 0
      %s26 = sadd.s32 %s25, 1
      %s27 = scalar_select %p24, %s25, %s26
      %p30 = pneg %p24
      %p31 = scmp.eq.s32.totalorder %s15, 1
      %p32 = por %p30, %p31
      %p33 = scmp.ne.s32.totalorder %s25, %s28
      %p34 = scmp.eq.s32.totalorder %s15, 0
      %p35 = por %p33, %p34
      %p36 = scmp.ne.s32.totalorder %s25, %s28
      %p37 = scmp.eq.s32.totalorder %s20, 1
      %p38 = por %p36, %p37
      %p39 = scmp.ne.s32.totalorder %s28, %s29
      %p40 = scmp.eq.s32.totalorder %s20, 0
      %p41 = por %p39, %p40
      %p42 = scmp.ne.s32.totalorder %s28, %s29
      %p43 = scmp.eq.s32.totalorder %s21, 1
      %p44 = por %p42, %p43
      %p46 = scmp.ne.s32.totalorder %s29, %s45
      %p47 = scmp.eq.s32.totalorder %s21, 0
      %p48 = por %p46, %p47
      %s49 = ssub.s32 %s15, %s22
      %p50 = scmp.eq.s32.totalorder %s49, 0
      %s52 = sadd.s32 %s51, 1
      %s53 = scalar_select %p50, %s51, %s52
      %p56 = pneg %p50
      %p57 = scmp.eq.s32.totalorder %s15, 1
      %p58 = por %p56, %p57
      %p59 = scmp.ne.s32.totalorder %s51, %s54
      %p60 = scmp.eq.s32.totalorder %s15, 0
      %p61 = por %p59, %p60
      %p62 = scmp.ne.s32.totalorder %s51, %s54
      %p63 = scmp.eq.s32.totalorder %s20, 1
      %p64 = por %p62, %p63
      %p65 = scmp.ne.s32.totalorder %s54, %s55
      %p66 = scmp.eq.s32.totalorder %s20, 0
      %p67 = por %p65, %p66
      %p68 = scmp.ne.s32.totalorder %s54, %s55
      %p69 = scmp.eq.s32.totalorder %s21, 1
      %p70 = por %p68, %p69
      %p72 = scmp.ne.s32.totalorder %s55, %s71
      %p73 = scmp.eq.s32.totalorder %s21, 0
      %p74 = por %p72, %p73
      %s76 = sadd.s32 %s75, 1
      %p79 = scmp.eq.s32.totalorder %s15, 1
      %p80 = scmp.ne.s32.totalorder %s75, %s77
      %p81 = scmp.eq.s32.totalorder %s15, 0
      %p82 = por %p80, %p81
      %p83 = scmp.ne.s32.totalorder %s75, %s77
      %p84 = scmp.eq.s32.totalorder %s20, 1
      %p85 = por %p83, %p84
      %p86 = scmp.ne.s32.totalorder %s77, %s78
      %p87 = scmp.eq.s32.totalorder %s20, 0
      %p88 = por %p86, %p87
      %p89 = scmp.ne.s32.totalorder %s77, %s78
      %p90 = scmp.eq.s32.totalorder %s21, 1
      %p91 = por %p89, %p90
      %p93 = scmp.ne.s32.totalorder %s78, %s92
      %p94 = scmp.eq.s32.totalorder %s21, 0
      %p95 = por %p93, %p94
      %s96 = ssub.s32 %s15, %s22
      %p97 = scmp.eq.s32.totalorder %s96, 0
      %s99 = sadd.s32 %s98, 1
      %s100 = scalar_select %p97, %s98, %s99
      %p103 = pneg %p97
      %p104 = scmp.eq.s32.totalorder %s15, 1
      %p105 = por %p103, %p104
      %p106 = scmp.ne.s32.totalorder %s98, %s101
      %p107 = scmp.eq.s32.totalorder %s15, 0
      %p108 = por %p106, %p107
      %p109 = scmp.ne.s32.totalorder %s98, %s101
      %p110 = scmp.eq.s32.totalorder %s20, 1
      %p111 = por %p109, %p110
      %p112 = scmp.ne.s32.totalorder %s101, %s102
      %p113 = scmp.eq.s32.totalorder %s20, 0
      %p114 = por %p112, %p113
      %p115 = scmp.ne.s32.totalorder %s101, %s102
      %p116 = scmp.eq.s32.totalorder %s21, 1
      %p117 = por %p115, %p116
      %p119 = scmp.ne.s32.totalorder %s102, %s118
      %p120 = scmp.eq.s32.totalorder %s21, 0
      %p121 = por %p119, %p120
      %p122 = scmp.le.s32.totalorder 1, %s15
      %p123 = scmp.lt.s32.totalorder %s15, 3
      %p124 = pnand %p122, %p123
      %p125 = pneg %p124
      // Predicated region
      $region9: #{tpu_custom_call.1} parent=5 // pred_check
        _
      $region10: #{tpu_custom_call.1} parent=5 // pred_check_branch
        %127 = sbr.rel (%p124) target = $region12
      $region11: #{tpu_custom_call.1} parent=5 // pred_region
        %s128 = ssub.s32 %s15, 1
        // Predicated region
        $region13: #{tpu_custom_call.1} parent=11 // pred_check
          %p129 = pneg %p88
        $region14: #{tpu_custom_call.1} parent=11 // pred_check_branch
          %131 = sbr.rel (%p129) target = $region16
        $region15: #{tpu_custom_call.1} parent=11 // pred_region
          _
        $region16: #{tpu_custom_call.1} parent=11 // pred_fallthru
          _
      $region12: #{tpu_custom_call.1} parent=5 // pred_fallthru
        _
      %p132 = scmp.lt.s32.totalorder %s15, 2
      // Predicated region
      $region17: #{tpu_custom_call.1} parent=5 // pred_check
        %p133 = pneg %p132
      $region18: #{tpu_custom_call.1} parent=5 // pred_check_branch
        %135 = sbr.rel (%p133) target = $region20
      $region19: #{tpu_custom_call.1} parent=5 // pred_region
        // Predicated region
        $region21: #{tpu_custom_call.1} parent=19 // pred_check
          %p136 = pneg %p35
        $region22: #{tpu_custom_call.1} parent=19 // pred_check_branch
          %138 = sbr.rel (%p136) target = $region24
        $region23: #{tpu_custom_call.1} parent=19 // pred_region
          %s139 = sand.u32 %s25, 1
          %s140 = scalar_lea.sflag [#allocation3], %s139
          %s141 = sand.u32 %s25, 1
          %s142 = smul.addr %s141, 64
          %s143 = scalar_lea.vmem [#allocation2], %s142
          %s144 = smul.u32 8, %s15
          %s146 = ssub.s32 1024, 1024
          %147 = vsyncadd %s140, %s146
          %s148 = smul.addr %s144, 128
          %s149 = scalar_lea.hbm %s0, %s148
          %s150 = sshll.u32 %s143, 4
          %s151 = int_to_ptr.vmem [resolvable:$true] %s150
          %156 = dma.hbm_to_vmem [thread:$0]  %s149, 1024, %s151, %s140, 128, 128, 8
        $region24: #{tpu_custom_call.1} parent=19 // pred_fallthru
          _
        // Predicated region
        $region25: #{tpu_custom_call.1} parent=19 // pred_check
          %p157 = pneg %p61
        $region26: #{tpu_custom_call.1} parent=19 // pred_check_branch
          %159 = sbr.rel (%p157) target = $region28
        $region27: #{tpu_custom_call.1} parent=19 // pred_region
          %p160 = scmp.lt.s32.totalorder %s15, 1
          %s161 = scalar_select %p160, %s15, 1
          %s162 = smul.addr %s161, 8
          %s163 = scalar_lea.vmem %s1, %s162
        $region28: #{tpu_custom_call.1} parent=19 // pred_fallthru
          _
      $region20: #{tpu_custom_call.1} parent=5 // pred_fallthru
        _
      %p164 = scmp.le.s32.totalorder 1, %s15
      %p165 = scmp.lt.s32.totalorder %s15, 3
      %p166 = pnand %p164, %p165
      %p167 = pneg %p166
      // Predicated region
      $region29: #{tpu_custom_call.1} parent=5 // pred_check
        _
      $region30: #{tpu_custom_call.1} parent=5 // pred_check_branch
        %169 = sbr.rel (%p166) target = $region32
      $region31: #{tpu_custom_call.1} parent=5 // pred_region
        %s170 = ssub.s32 %s15, 1
        %s171 = sand.u32 %s28, 1
        %s172 = scalar_lea.sflag [#allocation3], %s171
        %s173 = sand.u32 %s28, 1
        %s174 = smul.addr %s173, 64
        %s175 = scalar_lea.vmem [#allocation2], %s174
        // Predicated region
        $region33: #{tpu_custom_call.1} parent=31 // pred_check
          %p176 = pneg %p41
        $region34: #{tpu_custom_call.1} parent=31 // pred_check_branch
          %178 = sbr.rel (%p176) target = $region36
        $region35: #{tpu_custom_call.1} parent=31 // pred_region
          %179 = dma.done %s172, 1024
        $region36: #{tpu_custom_call.1} parent=31 // pred_fallthru
          _
        %s180 = sand.u32 %s28, 1
        %s181 = scalar_lea.sflag [#allocation3], %s180
        %s182 = sand.u32 %s28, 1
        %s183 = smul.addr %s182, 64
        %s184 = scalar_lea.vmem [#allocation2], %s183
        %p185 = pneg %p41
        %p186 = pneg %p38
        %p187 = scmp.lt.s32.totalorder %s20, 1
        %s188 = scalar_select %p187, %s20, 1
        %s189 = smul.addr %s188, 8
        %s190 = scalar_lea.vmem %s1, %s189
        %p191 = pneg %p67
        %p192 = pneg %p64
        %p193 = pneg %p88
        %p194 = pneg %p85
        %p195 = pneg %p114
        %p196 = pneg %p111
        %s197 = sand.u32 %s101, 1
        %s198 = scalar_lea.sflag [#allocation4], %s197
        %s199 = sand.u32 %s101, 1
        %s200 = smul.addr %s199, 8
        %s201 = scalar_lea.vmem [#allocation5], %s200
        %s202 = smul.u32 8, %s20
        %p203 = scmp.lt.s32.totalorder %s20, 1
        %s204 = scalar_select %p203, %s20, 1
        %s205 = smul.addr %s204, 8
        %s206 = scalar_lea.vmem %s1, %s205
        %v207 = vld [vmem:[%s175] sm:$0xff]
        %v208 = vld [vmem:[%s175 + $0x8] sm:$0xff]
        %v209 = vld [vmem:[%s175 + $0x10] sm:$0xff]
        %v210 = vld [vmem:[%s175 + $0x18] sm:$0xff]
        %v211 = vld [vmem:[%s175 + $0x20] sm:$0xff]
        %v212 = vld [vmem:[%s175 + $0x28] sm:$0xff]
        %v213 = vld [vmem:[%s175 + $0x30] sm:$0xff]
        %v214 = vld [vmem:[%s175 + $0x38] sm:$0xff]
        %v215 = vld [vmem:[%s2] sm:$0x1]
        %v217 = vlaneseq
        %v218 = vshrl.u32 %v217, 7
        %v219 = vsub.s32 0, %v218
        %v220 = vrot.slane %v215, %v219
        %v222 = vmul.f32 %v207, %v220
        %v223 = vmul.f32 %v208, %v220
        %v224 = vmul.f32 %v209, %v220
        %v225 = vmul.f32 %v210, %v220
        %v226 = vmul.f32 %v211, %v220
        %v227 = vmul.f32 %v212, %v220
        %v228 = vmul.f32 %v213, %v220
        %v229 = vmul.f32 %v214, %v220
        %vm230 = vcmask 261120
        %v231 = vsel %vm230, %v222, 0.0
        %232 = vadd.xlane.f32.xlu0 %v231
        %v233 = vpop.xlane.xlu0 %232
        %v234 = vsel %vm230, %v223, 0.0
        %235 = vadd.xlane.f32.xlu0 %v234
        %v236 = vpop.xlane.xlu0 %235
        %v237 = vsel %vm230, %v224, 0.0
        %238 = vadd.xlane.f32.xlu0 %v237
        %v239 = vpop.xlane.xlu0 %238
        %v240 = vsel %vm230, %v225, 0.0
        %241 = vadd.xlane.f32.xlu0 %v240
        %v242 = vpop.xlane.xlu0 %241
        %v243 = vsel %vm230, %v226, 0.0
        %244 = vadd.xlane.f32.xlu0 %v243
        %v245 = vpop.xlane.xlu0 %244
        %v246 = vsel %vm230, %v227, 0.0
        %247 = vadd.xlane.f32.xlu0 %v246
        %v248 = vpop.xlane.xlu0 %247
        %v249 = vsel %vm230, %v228, 0.0
        %250 = vadd.xlane.f32.xlu0 %v249
        %v251 = vpop.xlane.xlu0 %250
        %v252 = vsel %vm230, %v229, 0.0
        %253 = vadd.xlane.f32.xlu0 %v252
        %v254 = vpop.xlane.xlu0 %253
        %v255 = vld [vmem:[%s206] sm:$0xff]
        %v256 = vsub.f32 %v255, 1.0
        %v257 = vmul.f32 %v256, 1e+08
        %v259 = vlaneseq
        %v260 = vshrl.u32 %v259, 7
        %v261 = vsub.s32 0, %v260
        %v262 = vrot.slane %v257, %v261
        %264 = vbcast.lane.b32.xlu0 %v262, 256
        %v265 = vpop.permute.xlu0 %264
        %v266 = vlaneseq
        %v267 = vshrl.u32 %v266, 7
        %v268 = vsub.s32 1, %v267
        %v269 = vrot.slane %v257, %v268
        %271 = vbcast.lane.b32.xlu0 %v269, 256
        %v272 = vpop.permute.xlu0 %271
        %v273 = vlaneseq
        %v274 = vshrl.u32 %v273, 7
        %v275 = vsub.s32 2, %v274
        %v276 = vrot.slane %v257, %v275
        %278 = vbcast.lane.b32.xlu0 %v276, 256
        %v279 = vpop.permute.xlu0 %278
        %v280 = vlaneseq
        %v281 = vshrl.u32 %v280, 7
        %v282 = vsub.s32 3, %v281
        %v283 = vrot.slane %v257, %v282
        %285 = vbcast.lane.b32.xlu0 %v283, 256
        %v286 = vpop.permute.xlu0 %285
        %v287 = vlaneseq
        %v288 = vshrl.u32 %v287, 7
        %v289 = vsub.s32 4, %v288
        %v290 = vrot.slane %v257, %v289
        %292 = vbcast.lane.b32.xlu0 %v290, 256
        %v293 = vpop.permute.xlu0 %292
        %v294 = vlaneseq
        %v295 = vshrl.u32 %v294, 7
        %v296 = vsub.s32 5, %v295
        %v297 = vrot.slane %v257, %v296
        %299 = vbcast.lane.b32.xlu0 %v297, 256
        %v300 = vpop.permute.xlu0 %299
        %v301 = vlaneseq
        %v302 = vshrl.u32 %v301, 7
        %v303 = vsub.s32 6, %v302
        %v304 = vrot.slane %v257, %v303
        %306 = vbcast.lane.b32.xlu0 %v304, 256
        %v307 = vpop.permute.xlu0 %306
        %v308 = vlaneseq
        %v309 = vshrl.u32 %v308, 7
        %v310 = vsub.s32 7, %v309
        %v311 = vrot.slane %v257, %v310
        %313 = vbcast.lane.b32.xlu0 %v311, 256
        %v314 = vpop.permute.xlu0 %313
        %v323 = vadd.f32 %v233, %v265
        %v324 = vadd.f32 %v236, %v272
        %v325 = vadd.f32 %v239, %v279
        %v326 = vadd.f32 %v242, %v286
        %v327 = vadd.f32 %v245, %v293
        %v328 = vadd.f32 %v248, %v300
        %v329 = vadd.f32 %v251, %v307
        %v330 = vadd.f32 %v254, %v314
        %339 = vset.pattern.permute.xlu0 0
        %340 = vperm.xlu0 %339, %v323
        %v341 = vpop.permute.xlu0 %340
        %342 = vset.pattern.permute.xlu0 0
        %343 = vperm.xlu0 %342, %v324
        %v344 = vpop.permute.xlu0 %343
        %345 = vset.pattern.permute.xlu0 0
        %346 = vperm.xlu0 %345, %v325
        %v347 = vpop.permute.xlu0 %346
        %348 = vset.pattern.permute.xlu0 0
        %349 = vperm.xlu0 %348, %v326
        %v350 = vpop.permute.xlu0 %349
        %351 = vset.pattern.permute.xlu0 0
        %352 = vperm.xlu0 %351, %v327
        %v353 = vpop.permute.xlu0 %352
        %354 = vset.pattern.permute.xlu0 0
        %355 = vperm.xlu0 %354, %v328
        %v356 = vpop.permute.xlu0 %355
        %357 = vset.pattern.permute.xlu0 0
        %358 = vperm.xlu0 %357, %v329
        %v359 = vpop.permute.xlu0 %358
        %360 = vset.pattern.permute.xlu0 0
        %361 = vperm.xlu0 %360, %v330
        %v362 = vpop.permute.xlu0 %361
        %v363 = vlaneseq
        %v364 = vand.u32 %v363, 127
        %v365 = vlaneseq
        %v366 = vshrl.u32 %v365, 7
        %v367 = vsub.s32 %v364, %v366
        %v368 = vrot.slane %v341, %v367
        %v369 = vlaneseq
        %v370 = vshrl.u32 %v369, 7
        %v371 = vsub.s32 %v364, %v370
        %v372 = vrot.slane %v344, %v371
        %v373 = vlaneseq
        %v374 = vshrl.u32 %v373, 7
        %v375 = vsub.s32 %v364, %v374
        %v376 = vrot.slane %v347, %v375
        %v377 = vlaneseq
        %v378 = vshrl.u32 %v377, 7
        %v379 = vsub.s32 %v364, %v378
        %v380 = vrot.slane %v350, %v379
        %v381 = vlaneseq
        %v382 = vshrl.u32 %v381, 7
        %v383 = vsub.s32 %v364, %v382
        %v384 = vrot.slane %v353, %v383
        %v385 = vlaneseq
        %v386 = vshrl.u32 %v385, 7
        %v387 = vsub.s32 %v364, %v386
        %v388 = vrot.slane %v356, %v387
        %v389 = vlaneseq
        %v390 = vshrl.u32 %v389, 7
        %v391 = vsub.s32 %v364, %v390
        %v392 = vrot.slane %v359, %v391
        %v393 = vlaneseq
        %v394 = vshrl.u32 %v393, 7
        %v395 = vsub.s32 %v364, %v394
        %v396 = vrot.slane %v362, %v395
        %vm397 = vcmask 1041409
        %v398 = vsel %vm397, %v372, %v368
        %vm399 = vcmask 1042434
        %v400 = vsel %vm399, %v376, %v398
        %vm401 = vcmask 1043459
        %v402 = vsel %vm401, %v380, %v400
        %vm403 = vcmask 1044484
        %v404 = vsel %vm403, %v384, %v402
        %vm405 = vcmask 1045509
        %v406 = vsel %vm405, %v388, %v404
        %vm407 = vcmask 1046534
        %v408 = vsel %vm407, %v392, %v406
        %vm409 = vcmask 1047559
        %v410 = vsel %vm409, %v396, %v408
        %vm412 = vcmask 64512
        %v413 = vsel %vm412, %v410, -inf
        %414 = vmax.xlane.f32.xlu0 %v413
        %v415 = vpop.xlane.xlu0 %414
        %v417 = vlaneseq
        %v418 = vshrl.u32 %v417, 7
        %v419 = vsub.s32 0, %v418
        %v420 = vrot.slane %v415, %v419
        %v421 = vlaneseq
        %v422 = vshrl.u32 %v421, 7
        %v423 = vsub.s32 1, %v422
        %v424 = vrot.slane %v415, %v423
        %v425 = vlaneseq
        %v426 = vshrl.u32 %v425, 7
        %v427 = vsub.s32 2, %v426
        %v428 = vrot.slane %v415, %v427
        %v429 = vlaneseq
        %v430 = vshrl.u32 %v429, 7
        %v431 = vsub.s32 3, %v430
        %v432 = vrot.slane %v415, %v431
        %v433 = vlaneseq
        %v434 = vshrl.u32 %v433, 7
        %v435 = vsub.s32 4, %v434
        %v436 = vrot.slane %v415, %v435
        %v437 = vlaneseq
        %v438 = vshrl.u32 %v437, 7
        %v439 = vsub.s32 5, %v438
        %v440 = vrot.slane %v415, %v439
        %v441 = vlaneseq
        %v442 = vshrl.u32 %v441, 7
        %v443 = vsub.s32 6, %v442
        %v444 = vrot.slane %v415, %v443
        %v445 = vlaneseq
        %v446 = vshrl.u32 %v445, 7
        %v447 = vsub.s32 7, %v446
        %v448 = vrot.slane %v415, %v447
        %v457 = vsub.f32 %v323, %v420
        %v458 = vsub.f32 %v324, %v424
        %v459 = vsub.f32 %v325, %v428
        %v460 = vsub.f32 %v326, %v432
        %v461 = vsub.f32 %v327, %v436
        %v462 = vsub.f32 %v328, %v440
        %v463 = vsub.f32 %v329, %v444
        %v464 = vsub.f32 %v330, %v448
        %v465 = vmul.f32 %v457, 1.442695
        %v466 = vpow.pop %v465
        %v467 = vmul.f32 %v458, 1.442695
        %v468 = vpow.pop %v467
        %v469 = vmul.f32 %v459, 1.442695
        %v470 = vpow.pop %v469
        %v471 = vmul.f32 %v460, 1.442695
        %v472 = vpow.pop %v471
        %v473 = vmul.f32 %v461, 1.442695
        %v474 = vpow.pop %v473
        %v475 = vmul.f32 %v462, 1.442695
        %v476 = vpow.pop %v475
        %v477 = vmul.f32 %v463, 1.442695
        %v478 = vpow.pop %v477
        %v479 = vmul.f32 %v464, 1.442695
        %v480 = vpow.pop %v479
        %489 = vset.pattern.permute.xlu0 0
        %490 = vperm.xlu0 %489, %v466
        %v491 = vpop.permute.xlu0 %490
        %492 = vset.pattern.permute.xlu0 0
        %493 = vperm.xlu0 %492, %v468
        %v494 = vpop.permute.xlu0 %493
        %495 = vset.pattern.permute.xlu0 0
        %496 = vperm.xlu0 %495, %v470
        %v497 = vpop.permute.xlu0 %496
        %498 = vset.pattern.permute.xlu0 0
        %499 = vperm.xlu0 %498, %v472
        %v500 = vpop.permute.xlu0 %499
        %501 = vset.pattern.permute.xlu0 0
        %502 = vperm.xlu0 %501, %v474
        %v503 = vpop.permute.xlu0 %502
        %504 = vset.pattern.permute.xlu0 0
        %505 = vperm.xlu0 %504, %v476
        %v506 = vpop.permute.xlu0 %505
        %507 = vset.pattern.permute.xlu0 0
        %508 = vperm.xlu0 %507, %v478
        %v509 = vpop.permute.xlu0 %508
        %510 = vset.pattern.permute.xlu0 0
        %511 = vperm.xlu0 %510, %v480
        %v512 = vpop.permute.xlu0 %511
        %v513 = vlaneseq
        %v514 = vshrl.u32 %v513, 7
        %v515 = vsub.s32 %v364, %v514
        %v516 = vrot.slane %v491, %v515
        %v517 = vlaneseq
        %v518 = vshrl.u32 %v517, 7
        %v519 = vsub.s32 %v364, %v518
        %v520 = vrot.slane %v494, %v519
        %v521 = vlaneseq
        %v522 = vshrl.u32 %v521, 7
        %v523 = vsub.s32 %v364, %v522
        %v524 = vrot.slane %v497, %v523
        %v525 = vlaneseq
        %v526 = vshrl.u32 %v525, 7
        %v527 = vsub.s32 %v364, %v526
        %v528 = vrot.slane %v500, %v527
        %v529 = vlaneseq
        %v530 = vshrl.u32 %v529, 7
        %v531 = vsub.s32 %v364, %v530
        %v532 = vrot.slane %v503, %v531
        %v533 = vlaneseq
        %v534 = vshrl.u32 %v533, 7
        %v535 = vsub.s32 %v364, %v534
        %v536 = vrot.slane %v506, %v535
        %v537 = vlaneseq
        %v538 = vshrl.u32 %v537, 7
        %v539 = vsub.s32 %v364, %v538
        %v540 = vrot.slane %v509, %v539
        %v541 = vlaneseq
        %v542 = vshrl.u32 %v541, 7
        %v543 = vsub.s32 %v364, %v542
        %v544 = vrot.slane %v512, %v543
        %v545 = vsel %vm397, %v520, %v516
        %v546 = vsel %vm399, %v524, %v545
        %v547 = vsel %vm401, %v528, %v546
        %v548 = vsel %vm403, %v532, %v547
        %v549 = vsel %vm405, %v536, %v548
        %v550 = vsel %vm407, %v540, %v549
        %v551 = vsel %vm409, %v544, %v550
        %v553 = vsel %vm412, %v551, 0.0
        %554 = vadd.xlane.f32.xlu0 %v553
        %v555 = vpop.xlane.xlu0 %554
        %v556 = vrcp.pop %v555
        %v558 = vlaneseq
        %v559 = vshrl.u32 %v558, 7
        %v560 = vsub.s32 0, %v559
        %v561 = vrot.slane %v556, %v560
        %v562 = vlaneseq
        %v563 = vshrl.u32 %v562, 7
        %v564 = vsub.s32 1, %v563
        %v565 = vrot.slane %v556, %v564
        %v566 = vlaneseq
        %v567 = vshrl.u32 %v566, 7
        %v568 = vsub.s32 2, %v567
        %v569 = vrot.slane %v556, %v568
        %v570 = vlaneseq
        %v571 = vshrl.u32 %v570, 7
        %v572 = vsub.s32 3, %v571
        %v573 = vrot.slane %v556, %v572
        %v574 = vlaneseq
        %v575 = vshrl.u32 %v574, 7
        %v576 = vsub.s32 4, %v575
        %v577 = vrot.slane %v556, %v576
        %v578 = vlaneseq
        %v579 = vshrl.u32 %v578, 7
        %v580 = vsub.s32 5, %v579
        %v581 = vrot.slane %v556, %v580
        %v582 = vlaneseq
        %v583 = vshrl.u32 %v582, 7
        %v584 = vsub.s32 6, %v583
        %v585 = vrot.slane %v556, %v584
        %v586 = vlaneseq
        %v587 = vshrl.u32 %v586, 7
        %v588 = vsub.s32 7, %v587
        %v589 = vrot.slane %v556, %v588
        %v598 = vmul.f32 %v466, %v561
        %v599 = vmul.f32 %v468, %v565
        %v600 = vmul.f32 %v470, %v569
        %v601 = vmul.f32 %v472, %v573
        %v602 = vmul.f32 %v474, %v577
        %v603 = vmul.f32 %v476, %v581
        %v604 = vmul.f32 %v478, %v585
        %v605 = vmul.f32 %v480, %v589
        %607 = vset.pattern.permute.xlu0 0
        %608 = vperm.xlu0 %607, %v598
        %v609 = vpop.permute.xlu0 %608
        %612 = vset.pattern.permute.xlu0 0
        %613 = vperm.xlu0 %612, %v599
        %v614 = vpop.permute.xlu0 %613
        %617 = vset.pattern.permute.xlu0 0
        %618 = vperm.xlu0 %617, %v600
        %v619 = vpop.permute.xlu0 %618
        %622 = vset.pattern.permute.xlu0 0
        %623 = vperm.xlu0 %622, %v601
        %v624 = vpop.permute.xlu0 %623
        %627 = vset.pattern.permute.xlu0 0
        %628 = vperm.xlu0 %627, %v602
        %v629 = vpop.permute.xlu0 %628
        %632 = vset.pattern.permute.xlu0 0
        %633 = vperm.xlu0 %632, %v603
        %v634 = vpop.permute.xlu0 %633
        %637 = vset.pattern.permute.xlu0 0
        %638 = vperm.xlu0 %637, %v604
        %v639 = vpop.permute.xlu0 %638
        %642 = vset.pattern.permute.xlu0 0
        %643 = vperm.xlu0 %642, %v605
        %v644 = vpop.permute.xlu0 %643
        %v646 = vmul.f32 %v609, %v207
        %v647 = vmul.f32 %v614, %v208
        %v648 = vmul.f32 %v619, %v209
        %v649 = vmul.f32 %v624, %v210
        %v650 = vmul.f32 %v629, %v211
        %v651 = vmul.f32 %v634, %v212
        %v652 = vmul.f32 %v639, %v213
        %v653 = vmul.f32 %v644, %v214
        %v654 = vsel %vm230, %v646, 0.0
        %v655 = vrot.slane %v654, 4
        %v656 = vadd.f32 %v654, %v655
        %v657 = vrot.slane %v656, 2
        %v658 = vadd.f32 %v656, %v657
        %v659 = vrot.slane %v658, 1
        %v660 = vadd.f32 %v658, %v659
        %v661 = vsel %vm230, %v647, 0.0
        %v662 = vrot.slane %v661, 4
        %v663 = vadd.f32 %v661, %v662
        %v664 = vrot.slane %v663, 2
        %v665 = vadd.f32 %v663, %v664
        %v666 = vrot.slane %v665, 1
        %v667 = vadd.f32 %v665, %v666
        %v668 = vsel %vm230, %v648, 0.0
        %v669 = vrot.slane %v668, 4
        %v670 = vadd.f32 %v668, %v669
        %v671 = vrot.slane %v670, 2
        %v672 = vadd.f32 %v670, %v671
        %v673 = vrot.slane %v672, 1
        %v674 = vadd.f32 %v672, %v673
        %v675 = vsel %vm230, %v649, 0.0
        %v676 = vrot.slane %v675, 4
        %v677 = vadd.f32 %v675, %v676
        %v678 = vrot.slane %v677, 2
        %v679 = vadd.f32 %v677, %v678
        %v680 = vrot.slane %v679, 1
        %v681 = vadd.f32 %v679, %v680
        %v682 = vsel %vm230, %v650, 0.0
        %v683 = vrot.slane %v682, 4
        %v684 = vadd.f32 %v682, %v683
        %v685 = vrot.slane %v684, 2
        %v686 = vadd.f32 %v684, %v685
        %v687 = vrot.slane %v686, 1
        %v688 = vadd.f32 %v686, %v687
        %v689 = vsel %vm230, %v651, 0.0
        %v690 = vrot.slane %v689, 4
        %v691 = vadd.f32 %v689, %v690
        %v692 = vrot.slane %v691, 2
        %v693 = vadd.f32 %v691, %v692
        %v694 = vrot.slane %v693, 1
        %v695 = vadd.f32 %v693, %v694
        %v696 = vsel %vm230, %v652, 0.0
        %v697 = vrot.slane %v696, 4
        %v698 = vadd.f32 %v696, %v697
        %v699 = vrot.slane %v698, 2
        %v700 = vadd.f32 %v698, %v699
        %v701 = vrot.slane %v700, 1
        %v702 = vadd.f32 %v700, %v701
        %v703 = vsel %vm230, %v653, 0.0
        %v704 = vrot.slane %v703, 4
        %v705 = vadd.f32 %v703, %v704
        %v706 = vrot.slane %v705, 2
        %v707 = vadd.f32 %v705, %v706
        %v708 = vrot.slane %v707, 1
        %v709 = vadd.f32 %v707, %v708
        %v718 = vsel %vm397, %v667, %v660
        %v719 = vsel %vm399, %v674, %v718
        %v720 = vsel %vm401, %v681, %v719
        %v721 = vsel %vm403, %v688, %v720
        %v722 = vsel %vm405, %v695, %v721
        %v723 = vsel %vm407, %v702, %v722
        %v724 = vsel %vm409, %v709, %v723
        %726 = vst.msk [vmem:[%s201] sm:$0xff] %vm230, %v724
        %s727 = sand.u32 %s101, 1
        %s728 = scalar_lea.sflag [#allocation4], %s727
        %s729 = sand.u32 %s101, 1
        %s730 = smul.addr %s729, 8
        %s731 = scalar_lea.vmem [#allocation5], %s730
        // Predicated region
        $region37: #{tpu_custom_call.1} parent=31 // pred_check
          %p732 = pneg %p111
        $region38: #{tpu_custom_call.1} parent=31 // pred_check_branch
          %734 = sbr.rel (%p732) target = $region40
        $region39: #{tpu_custom_call.1} parent=31 // pred_region
          %s736 = ssub.s32 128, 128
          %737 = vsyncadd %s728, %s736
          %s738 = smul.addr %s20, 128
          %s739 = scalar_lea.hbm %s3, %s738
          %s741 = sshll.u32 %s731, 4
          %s742 = int_to_ptr.vmem [resolvable:$true] %s741
          %744 = dma.vmem_to_hbm [thread:$0]  %s742, 128, %s739, %s728
        $region40: #{tpu_custom_call.1} parent=31 // pred_fallthru
          _
      $region32: #{tpu_custom_call.1} parent=5 // pred_fallthru
        _
      %p745 = scmp.le.s32.totalorder 2, %s15
      // Predicated region
      $region41: #{tpu_custom_call.1} parent=5 // pred_check
        %p746 = pneg %p745
      $region42: #{tpu_custom_call.1} parent=5 // pred_check_branch
        %748 = sbr.rel (%p746) target = $region44
      $region43: #{tpu_custom_call.1} parent=5 // pred_region
        %s749 = ssub.s32 %s15, 2
        // Predicated region
        $region45: #{tpu_custom_call.1} parent=43 // pred_check
          %p750 = pneg %p117
        $region46: #{tpu_custom_call.1} parent=43 // pred_check_branch
          %752 = sbr.rel (%p750) target = $region48
        $region47: #{tpu_custom_call.1} parent=43 // pred_region
          %s753 = sand.u32 %s102, 1
          %s754 = scalar_lea.sflag [#allocation4], %s753
          %s755 = sand.u32 %s102, 1
          %s756 = smul.addr %s755, 8
          %s757 = scalar_lea.vmem [#allocation5], %s756
          %758 = dma.done %s754, 128
        $region48: #{tpu_custom_call.1} parent=43 // pred_fallthru
          _
      $region44: #{tpu_custom_call.1} parent=5 // pred_fallthru
        _
    $region6: #{tpu_custom_call.1} parent=1 // loop_footer
      %s19 = sadd.s32 1, %s15
    $region7: #{tpu_custom_call.1} parent=1 // loop_footer_branch
      %14 = sbr.rel target = $region3
    $region8: #{tpu_custom_call.1} parent=1 // loop_exit
      _
    %759 = vsyncpa [#allocation3], 1
    %s760 = scalar_lea.sflag [#allocation3], 1
    %761 = vsyncpa %s760, 1
    %762 = vsyncpa [#allocation4], 1
    %s763 = scalar_lea.sflag [#allocation4], 1
    %764 = vsyncpa %s763, 1

</llo_original>
